<compile_context>
chip_gen: v7x
topology: tpu7x:2x2x1
jax: 0.10.0
libtpu: 0.0.40
codegen_flags: <defaults>
</compile_context>

<pallas_src>
import functools

import jax
import jax.numpy as jnp
from jax.experimental import pallas as pl
from jax.experimental.pallas import tpu as pltpu

TARGET_VOLATILITY = 0.1
COST_RATE = 0.001
EPS = 1e-14

# Raw HBM bytes each input should stream per grid step (DMA-efficiency target).
_DMA_BYTES_TARGET = 1 << 20          # ~1 MiB per input per step


def _round_up(x, m):
    return (x + m - 1) // m * m


def _vmem_limit_bytes():
    """Generation-aware scoped-VMEM limit (v7x: 64 MiB physical, v5e/v6e: 128)."""
    phys = 64 * 1024 * 1024           # conservative fallback = v7x per-core VMEM
    try:
        info = pltpu.get_tpu_info()
        phys = int(getattr(info, "vmem_capacity_bytes", phys))
    except Exception:
        pass
    return int(min(phys * 3 // 4, 100 * 1024 * 1024))


def _pick_block_b(b, t, n, itemsize, vmem_limit):
    """Return (block_b, padded_b).

    block_b is sized so each input streams ~_DMA_BYTES_TARGET raw HBM bytes per
    grid step, capped by a VMEM footprint check (3 inputs x 2 pipeline buffers
    + ~8 live f32 temporaries per batch panel) and by the ">= 2 grid steps"
    rule (megacore sharding + pipeline overlap).  If B has no divisor near the
    target (e.g. prime B), B is padded instead of collapsing to block_b = 1.
    """
    raw_in = t * n * itemsize
    padded_in = _round_up(t, 8) * _round_up(n, 128) * itemsize
    padded_f32 = _round_up(t, 8) * _round_up(n, 128) * 4
    per_batch_vmem = 3 * 2 * padded_in + 8 * padded_f32

    dma_want = max(1, _DMA_BYTES_TARGET // raw_in)
    vmem_cap = max(1, (vmem_limit // 2) // per_batch_vmem)
    cap = min(dma_want, vmem_cap, b)
    if b >= 2:
        cap = min(cap, b // 2)        # keep >= 2 grid steps
    cap = max(cap, 1)

    best = 1
    for cand in range(cap, 0, -1):    # largest divisor of b not exceeding cap
        if b % cand == 0:
            best = cand
            break
    if best * 2 >= cap:               # close enough to the target: no padding
        return best, b
    # Awkward batch size: pad B (edge-replicated) so the full cap can be used.
    return cap, _round_up(b, cap)


def _sharpe_loss_kernel(w_ref, r_ref, v_ref, sharpe_ref, std_ref):
    _, t, _ = w_ref.shape

    w = w_ref[...].astype(jnp.float32)          # (block_b, T, N)
    r = r_ref[...].astype(jnp.float32)
    v = v_ref[...].astype(jnp.float32)

    # --- softmax over assets (exact divide: parity with torch.softmax) ------
    m = jnp.max(w, axis=-1, keepdims=True)
    e = jnp.exp(w - m)
    soft = e / jnp.sum(e, axis=-1, keepdims=True)

    # --- volatility targeting (exact divide; cost hidden under input DMAs) --
    wt = TARGET_VOLATILITY * soft / (v + 1e-14)

    # --- portfolio returns over assets -> (block_b, T, 1) -------------------
    port = jnp.sum(wt * r, axis=-1, keepdims=True)

    # --- transaction costs from weight turnover -----------------------------
    # wt_prev[:, s] = wt[:, s-1] via an XLU sublane roll (no unaligned slice
    # copies / concatenates).  The wrapped row 0 is fully overwritten below.
    wt_prev = pltpu.roll(wt, shift=1, axis=1)
    tc = COST_RATE * jnp.sum(jnp.abs(wt - wt_prev), axis=-1, keepdims=True)
    # The reference repeats the first real cost (|wt[1] - wt[0]|) at t == 0.
    t_idx = jax.lax.broadcasted_iota(jnp.int32, (1, t, 1), 1)
    tc_at_1 = jnp.sum(jnp.where(t_idx == 1, tc, 0.0), axis=1, keepdims=True)
    tc = jnp.where(t_idx == 0, tc_at_1, tc)
    port = port - tc

    # --- per-batch mean / unbiased std over time (torch.std: ddof=1) --------
    mean_r = jnp.sum(port, axis=1, keepdims=True) * (1.0 / t)
    diff = port - mean_r
    var = jnp.sum(diff * diff, axis=1, keepdims=True) * (1.0 / (t - 1))
    std = jnp.sqrt(var)

    # One vector store per output block (no per-scalar vst.msk stores).
    sharpe_ref[...] = mean_r / (std + EPS)
    std_ref[...] = std


@functools.partial(jax.jit,
                   static_argnames=("block_b", "padded_b", "vmem_limit"))
def _sharpe_loss_device(weights, returns, volatility_estimate, *, block_b,
                        padded_b, vmem_limit):
    b, t, n = weights.shape
    if padded_b != b:
        pad = ((0, padded_b - b), (0, 0), (0, 0))
        weights = jnp.pad(weights, pad, mode="edge")
        returns = jnp.pad(returns, pad, mode="edge")
        volatility_estimate = jnp.pad(volatility_estimate, pad, mode="edge")

    grid = (padded_b // block_b,)
    # Each block spans the full (T, N) extent -> the HBM slab is contiguous.
    in_spec = pl.BlockSpec((block_b, t, n), lambda i: (i, 0, 0))
    out_spec = pl.BlockSpec((block_b, 1, 1), lambda i: (i, 0, 0))

    itemsize = jnp.dtype(weights.dtype).itemsize
    cost = pl.CostEstimate(
        flops=int(12 * padded_b * t * n),
        transcendentals=int(padded_b * t * n),
        bytes_accessed=int(3 * padded_b * t * n * itemsize + 2 * padded_b * 4),
    )

    sharpe, std = pl.pallas_call(
        _sharpe_loss_kernel,
        grid=grid,
        in_specs=[in_spec, in_spec, in_spec],
        out_specs=(out_spec, out_spec),
        out_shape=(
            jax.ShapeDtypeStruct((padded_b, 1, 1), jnp.float32),
            jax.ShapeDtypeStruct((padded_b, 1, 1), jnp.float32),
        ),
        compiler_params=pltpu.CompilerParams(
            dimension_semantics=("parallel",),
            vmem_limit_bytes=vmem_limit,
        ),
        cost_estimate=cost,
    )(weights, returns, volatility_estimate)

    sharpe = sharpe[:b, 0, 0]
    std = std[:b, 0, 0]
    return -jnp.mean(sharpe), jnp.min(std)


def sharpe_loss(weights, returns, volatility_estimate, *, block_b=None,
                check_eps=False):
    """Pallas-TPU forward pass of SharpeLoss.  Inputs: [B, T, N], f32 or bf16.

    check_eps=True reproduces the PyTorch module's ValueError guard; it forces
    a device->host sync, so leave it off inside training loops.
    """
    b, t, n = weights.shape
    if t < 2:
        raise ValueError("SharpeLoss requires at least 2 time steps")

    vmem_limit = _vmem_limit_bytes()
    if block_b is None:
        block_b, padded_b = _pick_block_b(
            b, t, n, jnp.dtype(weights.dtype).itemsize, vmem_limit)
    else:
        padded_b = _round_up(b, block_b)

    loss, min_std = _sharpe_loss_device(
        weights, returns, volatility_estimate,
        block_b=block_b, padded_b=padded_b, vmem_limit=vmem_limit)

    if check_eps:
        if EPS > float(min_std) * 0.001:
            raise ValueError('Epsilon is too large, consider reducing it')

    return loss


def _sharpe_loss_ref(weights, returns, volatility_estimate):
    """Pure-JAX transcription of the PyTorch module (sanity check only)."""
    w = jax.nn.softmax(weights.astype(jnp.float32), axis=-1)
    w = TARGET_VOLATILITY * w / (volatility_estimate.astype(jnp.float32) + 1e-14)
    port = jnp.sum(w * returns.astype(jnp.float32), axis=-1)
    tc = COST_RATE * jnp.sum(jnp.abs(w[:, 1:, :] - w[:, :-1, :]), axis=-1)
    tc = jnp.concatenate([tc[:, :1], tc], axis=1)
    port = port - tc
    mean_r = jnp.mean(port, axis=1)
    std_r = jnp.std(port, axis=1, ddof=1)
    return -jnp.mean(mean_r / (std_r + EPS))


if __name__ == "__main__":
    key = jax.random.PRNGKey(0)
    k1, k2, k3 = jax.random.split(key, 3)

    B, T, N = 4, 32, 16  # batch, time steps, assets
    weights = jax.random.normal(k1, (B, T, N), dtype=jnp.float32)
    returns = 0.01 * jax.random.normal(k2, (B, T, N), dtype=jnp.float32)
    volatility_estimate = jax.random.uniform(
        k3, (B, T, N), dtype=jnp.float32, minval=0.05, maxval=0.3)

    # Auto block sizing picks block_b=2 here -> a 2-step "parallel" grid, which
    # exercises the pipelined / megacore path.
    loss = sharpe_loss(weights, returns, volatility_estimate, check_eps=True)
    jax.block_until_ready(loss)

    # Sanity check against a pure-JAX transcription of the module (both f32,
    # exact divides; only reduction-order differences remain).
    ref = _sharpe_loss_ref(weights, returns, volatility_estimate)
    if not jnp.allclose(loss, ref, rtol=5e-3, atol=1e-4):
        raise RuntimeError(
            f"Pallas/ref mismatch: {float(loss):.6f} vs {float(ref):.6f}")

    print("KERNEL_OK")
</pallas_src>

<mosaic_0001>
module attributes {stable_mosaic.version = 11 : i64} {
  func.func @_sharpe_loss_kernel(%arg0: i32, %arg1: memref<2x32x16xf32, #tpu.memory_space<vmem>>, %arg2: memref<2x32x16xf32, #tpu.memory_space<vmem>>, %arg3: memref<2x32x16xf32, #tpu.memory_space<vmem>>, %arg4: memref<2x1x1xf32, #tpu.memory_space<vmem>>, %arg5: memref<2x1x1xf32, #tpu.memory_space<vmem>>) attributes {dimension_semantics = [#tpu.dimension_semantics<parallel>], iteration_bounds = array<i64: 2>, scalar_prefetch = 0 : i64, scratch_operands = 0 : i64, tpu.core_type = #tpu.core_type<tc>, window_params = [{transform_indices = @transform_0, window_bounds = array<i64: 2, 32, 16>}, {transform_indices = @transform_1, window_bounds = array<i64: 2, 32, 16>}, {transform_indices = @transform_2, window_bounds = array<i64: 2, 32, 16>}, {transform_indices = @transform_3, window_bounds = array<i64: 2, 1, 1>}, {transform_indices = @transform_4, window_bounds = array<i64: 2, 1, 1>}]} {
    %c0 = arith.constant 0 : index
    %c0_0 = arith.constant 0 : index
    %c0_1 = arith.constant 0 : index
    %0 = vector.load %arg1[%c0, %c0_0, %c0_1] : memref<2x32x16xf32, #tpu.memory_space<vmem>>, vector<2x32x16xf32>
    %c0_2 = arith.constant 0 : index
    %c0_3 = arith.constant 0 : index
    %c0_4 = arith.constant 0 : index
    %1 = vector.load %arg2[%c0_2, %c0_3, %c0_4] : memref<2x32x16xf32, #tpu.memory_space<vmem>>, vector<2x32x16xf32>
    %c0_5 = arith.constant 0 : index
    %c0_6 = arith.constant 0 : index
    %c0_7 = arith.constant 0 : index
    %2 = vector.load %arg3[%c0_5, %c0_6, %c0_7] : memref<2x32x16xf32, #tpu.memory_space<vmem>>, vector<2x32x16xf32>
    %cst = arith.constant dense<0xFF800000> : vector<2x32xf32>
    %3 = vector.multi_reduction <maximumf>, %0, %cst [2] : vector<2x32x16xf32> to vector<2x32xf32>
    %4 = vector.shape_cast %3 : vector<2x32xf32> to vector<2x32x1xf32>
    %5 = vector.broadcast %4 : vector<2x32x1xf32> to vector<2x32x16xf32>
    %6 = arith.subf %0, %5 : vector<2x32x16xf32>
    %7 = math.exp %6 : vector<2x32x16xf32>
    %cst_8 = arith.constant dense<0.000000e+00> : vector<2x32xf32>
    %8 = vector.multi_reduction <add>, %7, %cst_8 [2] : vector<2x32x16xf32> to vector<2x32xf32>
    %9 = vector.shape_cast %8 : vector<2x32xf32> to vector<2x32x1xf32>
    %10 = vector.broadcast %9 : vector<2x32x1xf32> to vector<2x32x16xf32>
    %11 = arith.divf %7, %10 : vector<2x32x16xf32>
    %cst_9 = arith.constant 1.000000e-01 : f32
    %12 = vector.broadcast %cst_9 : f32 to vector<2x32x16xf32>
    %13 = arith.mulf %12, %11 : vector<2x32x16xf32>
    %cst_10 = arith.constant 9.99999982E-15 : f32
    %14 = vector.broadcast %cst_10 : f32 to vector<2x32x16xf32>
    %15 = arith.addf %2, %14 : vector<2x32x16xf32>
    %16 = arith.divf %13, %15 : vector<2x32x16xf32>
    %17 = arith.mulf %16, %1 : vector<2x32x16xf32>
    %cst_11 = arith.constant dense<0.000000e+00> : vector<2x32xf32>
    %18 = vector.multi_reduction <add>, %17, %cst_11 [2] : vector<2x32x16xf32> to vector<2x32xf32>
    %19 = vector.shape_cast %18 : vector<2x32xf32> to vector<2x32x1xf32>
    %c1_i32 = arith.constant 1 : i32
    %20 = tpu.dynamic_rotate %16 by %c1_i32 dim 1 : vector<2x32x16xf32>, i32 -> vector<2x32x16xf32>
    %21 = arith.subf %16, %20 : vector<2x32x16xf32>
    %22 = math.absf %21 : vector<2x32x16xf32>
    %cst_12 = arith.constant dense<0.000000e+00> : vector<2x32xf32>
    %23 = vector.multi_reduction <add>, %22, %cst_12 [2] : vector<2x32x16xf32> to vector<2x32xf32>
    %24 = vector.shape_cast %23 : vector<2x32xf32> to vector<2x32x1xf32>
    %cst_13 = arith.constant 1.000000e-03 : f32
    %25 = vector.broadcast %cst_13 : f32 to vector<2x32x1xf32>
    %26 = arith.mulf %25, %24 : vector<2x32x1xf32>
    %27 = tpu.iota {dimensions = array<i32: 1>} : vector<1x32x1xi32>
    %c1_i32_14 = arith.constant 1 : i32
    %28 = vector.broadcast %c1_i32_14 : i32 to vector<1x32x1xi32>
    %29 = arith.cmpi eq, %27, %28 : vector<1x32x1xi32>
    %cst_15 = arith.constant 0.000000e+00 : f32
    %30 = vector.shape_cast %29 : vector<1x32x1xi1> to vector<1x32x1xi1>
    %31 = vector.broadcast %30 : vector<1x32x1xi1> to vector<2x32x1xi1>
    %32 = vector.broadcast %cst_15 : f32 to vector<2x32x1xf32>
    %33 = arith.select %31, %26, %32 : vector<2x32x1xi1>, vector<2x32x1xf32>
    %cst_16 = arith.constant dense<0.000000e+00> : vector<2x1xf32>
    %34 = vector.multi_reduction <add>, %33, %cst_16 [1] : vector<2x32x1xf32> to vector<2x1xf32>
    %35 = vector.shape_cast %34 : vector<2x1xf32> to vector<2x1x1xf32>
    %c0_i32 = arith.constant 0 : i32
    %36 = vector.broadcast %c0_i32 : i32 to vector<1x32x1xi32>
    %37 = arith.cmpi eq, %27, %36 : vector<1x32x1xi32>
    %38 = vector.shape_cast %37 : vector<1x32x1xi1> to vector<1x32x1xi1>
    %39 = vector.broadcast %38 : vector<1x32x1xi1> to vector<2x32x1xi1>
    %40 = vector.shape_cast %35 : vector<2x1x1xf32> to vector<2x1x1xf32>
    %41 = vector.broadcast %40 : vector<2x1x1xf32> to vector<2x32x1xf32>
    %42 = arith.select %39, %41, %26 : vector<2x32x1xi1>, vector<2x32x1xf32>
    %43 = arith.subf %19, %42 : vector<2x32x1xf32>
    %cst_17 = arith.constant dense<0.000000e+00> : vector<2x1xf32>
    %44 = vector.multi_reduction <add>, %43, %cst_17 [1] : vector<2x32x1xf32> to vector<2x1xf32>
    %45 = vector.shape_cast %44 : vector<2x1xf32> to vector<2x1x1xf32>
    %cst_18 = arith.constant 3.125000e-02 : f32
    %46 = vector.broadcast %cst_18 : f32 to vector<2x1x1xf32>
    %47 = arith.mulf %45, %46 : vector<2x1x1xf32>
    %48 = vector.broadcast %47 : vector<2x1x1xf32> to vector<2x32x1xf32>
    %49 = arith.subf %43, %48 : vector<2x32x1xf32>
    %50 = arith.mulf %49, %49 : vector<2x32x1xf32>
    %cst_19 = arith.constant dense<0.000000e+00> : vector<2x1xf32>
    %51 = vector.multi_reduction <add>, %50, %cst_19 [1] : vector<2x32x1xf32> to vector<2x1xf32>
    %52 = vector.shape_cast %51 : vector<2x1xf32> to vector<2x1x1xf32>
    %cst_20 = arith.constant 0.0322580636 : f32
    %53 = vector.broadcast %cst_20 : f32 to vector<2x1x1xf32>
    %54 = arith.mulf %52, %53 : vector<2x1x1xf32>
    %55 = math.sqrt %54 : vector<2x1x1xf32>
    %cst_21 = arith.constant 9.99999982E-15 : f32
    %56 = vector.broadcast %cst_21 : f32 to vector<2x1x1xf32>
    %57 = arith.addf %55, %56 : vector<2x1x1xf32>
    %58 = arith.divf %47, %57 : vector<2x1x1xf32>
    %c0_22 = arith.constant 0 : index
    %c0_23 = arith.constant 0 : index
    %c0_24 = arith.constant 0 : index
    %59 = vector.load %arg4[%c0_22, %c0_23, %c0_24] : memref<2x1x1xf32, #tpu.memory_space<vmem>>, vector<2x1x1xf32>
    tpu.vector_store %arg4[%c0_22, %c0_23, %c0_24], %58 {strides = array<i32>} : memref<2x1x1xf32, #tpu.memory_space<vmem>>, vector<2x1x1xf32>,
    %c0_25 = arith.constant 0 : index
    %c0_26 = arith.constant 0 : index
    %c0_27 = arith.constant 0 : index
    %60 = vector.load %arg5[%c0_25, %c0_26, %c0_27] : memref<2x1x1xf32, #tpu.memory_space<vmem>>, vector<2x1x1xf32>
    tpu.vector_store %arg5[%c0_25, %c0_26, %c0_27], %55 {strides = array<i32>} : memref<2x1x1xf32, #tpu.memory_space<vmem>>, vector<2x1x1xf32>,
    return
  }
  func.func @transform_0(%arg0: i32) -> (i32, i32, i32) {
    %c0_i32 = arith.constant 0 : i32
    %c0_i32_0 = arith.constant 0 : i32
    %c0_i32_1 = arith.constant 0 : i32
    return %arg0, %c0_i32, %c0_i32_0 : i32, i32, i32
  }
  func.func @transform_1(%arg0: i32) -> (i32, i32, i32) {
    %c0_i32 = arith.constant 0 : i32
    %c0_i32_0 = arith.constant 0 : i32
    %c0_i32_1 = arith.constant 0 : i32
    return %arg0, %c0_i32, %c0_i32_0 : i32, i32, i32
  }
  func.func @transform_2(%arg0: i32) -> (i32, i32, i32) {
    %c0_i32 = arith.constant 0 : i32
    %c0_i32_0 = arith.constant 0 : i32
    %c0_i32_1 = arith.constant 0 : i32
    return %arg0, %c0_i32, %c0_i32_0 : i32, i32, i32
  }
  func.func @transform_3(%arg0: i32) -> (i32, i32, i32) {
    %c0_i32 = arith.constant 0 : i32
    %c0_i32_0 = arith.constant 0 : i32
    %c0_i32_1 = arith.constant 0 : i32
    return %arg0, %c0_i32, %c0_i32_0 : i32, i32, i32
  }
  func.func @transform_4(%arg0: i32) -> (i32, i32, i32) {
    %c0_i32 = arith.constant 0 : i32
    %c0_i32_0 = arith.constant 0 : i32
    %c0_i32_1 = arith.constant 0 : i32
    return %arg0, %c0_i32, %c0_i32_0 : i32, i32, i32
  }
}

</mosaic_0001>

<llo_original>
// kernel: _sharpe_loss_device.1
$region0: #{_sharpe_loss_device.1}
  #allocation0 [shape = 'u32[]', space=smem, size = 0x4, offset = 0x4, fixed_abs, tag = 'smem constant byte address 0x4 - core index']
  #allocation1 [shape = 'u32[144,128]{1,0:T(1,128)}', space=vmem, size = 0x12000, scoped, tag = 'internal scratch']
  %s0 = inlined_call_operand.vmem [shape: f32[4,32,16], index: 0, kind: input, shape index: {}]
  %s1 = inlined_call_operand.vmem [shape: f32[4,32,16], index: 1, kind: input, shape index: {}]
  %s2 = inlined_call_operand.vmem [shape: f32[4,32,16], index: 2, kind: input, shape index: {}]
  %s3 = inlined_call_operand.vmem [shape: f32[4,1,1], index: 3, kind: output, shape index: {0}]
  %s4 = inlined_call_operand.vmem [shape: f32[4,1,1], index: 4, kind: output, shape index: {1}]
  %5 = xla_tuple %s3, %s4
  %s6 = sld [smem:[#allocation0]]
  $region53: #{_sharpe_loss_device.1} parent=0
    _
  %s8 = ssub.s32 1, %s6
  %s9 = scalar_select 0, %s8, %s6
  loop: start=0, step=1, limit=4
  $region2: #{_sharpe_loss_device.1} parent=0 // loop_pre_header
    _
  $region3: #{_sharpe_loss_device.1} parent=0 // loop_header
    %s11 = sphi 0, %s15
    %p12 = scmp.ge.s32.totalorder %s11, 4
    %s21 = sphi 0, %s23
    %s24 = sphi 0, %s21
    %s25 = sphi 0, %s24
    %s41 = sphi 0, %s25
    %s47 = sphi 0, %s49
    %s50 = sphi 0, %s47
    %s51 = sphi 0, %s50
    %s67 = sphi 0, %s51
    %s73 = sphi 0, %s75
    %s76 = sphi 0, %s73
    %s77 = sphi 0, %s76
    %s93 = sphi 0, %s77
    %s99 = sphi 0, %s101
    %s102 = sphi 0, %s99
    %s103 = sphi 0, %s102
    %s119 = sphi 0, %s103
    %s125 = sphi 0, %s127
    %s128 = sphi 0, %s125
    %s129 = sphi 0, %s128
    %s145 = sphi 0, %s129
  $region4: #{_sharpe_loss_device.1} parent=0 // loop_header_branch
    %14 = sbr.rel (%p12) target = $region8
  $region5: #{_sharpe_loss_device.1} parent=0 // loop_body
    %s16 = ssub.s32 %s11, 1
    %s17 = ssub.s32 %s11, 2
    %s18 = sadd.s32 %s11, 1
    %s19 = ssub.s32 %s11, %s18
    %p20 = scmp.eq.s32.totalorder %s19, 0
    %s22 = sadd.s32 %s21, 1
    %s23 = scalar_select %p20, %s21, %s22
    %p26 = pneg %p20
    %p27 = scmp.eq.s32.totalorder %s11, 1
    %p28 = por %p26, %p27
    %p29 = scmp.ne.s32.totalorder %s21, %s24
    %p30 = scmp.eq.s32.totalorder %s11, 0
    %p31 = por %p29, %p30
    %p32 = scmp.ne.s32.totalorder %s21, %s24
    %p33 = scmp.eq.s32.totalorder %s16, 1
    %p34 = por %p32, %p33
    %p35 = scmp.ne.s32.totalorder %s24, %s25
    %p36 = scmp.eq.s32.totalorder %s16, 0
    %p37 = por %p35, %p36
    %p38 = scmp.ne.s32.totalorder %s24, %s25
    %p39 = scmp.eq.s32.totalorder %s17, 1
    %p40 = por %p38, %p39
    %p42 = scmp.ne.s32.totalorder %s25, %s41
    %p43 = scmp.eq.s32.totalorder %s17, 0
    %p44 = por %p42, %p43
    %s45 = ssub.s32 %s11, %s18
    %p46 = scmp.eq.s32.totalorder %s45, 0
    %s48 = sadd.s32 %s47, 1
    %s49 = scalar_select %p46, %s47, %s48
    %p52 = pneg %p46
    %p53 = scmp.eq.s32.totalorder %s11, 1
    %p54 = por %p52, %p53
    %p55 = scmp.ne.s32.totalorder %s47, %s50
    %p56 = scmp.eq.s32.totalorder %s11, 0
    %p57 = por %p55, %p56
    %p58 = scmp.ne.s32.totalorder %s47, %s50
    %p59 = scmp.eq.s32.totalorder %s16, 1
    %p60 = por %p58, %p59
    %p61 = scmp.ne.s32.totalorder %s50, %s51
    %p62 = scmp.eq.s32.totalorder %s16, 0
    %p63 = por %p61, %p62
    %p64 = scmp.ne.s32.totalorder %s50, %s51
    %p65 = scmp.eq.s32.totalorder %s17, 1
    %p66 = por %p64, %p65
    %p68 = scmp.ne.s32.totalorder %s51, %s67
    %p69 = scmp.eq.s32.totalorder %s17, 0
    %p70 = por %p68, %p69
    %s71 = ssub.s32 %s11, %s18
    %p72 = scmp.eq.s32.totalorder %s71, 0
    %s74 = sadd.s32 %s73, 1
    %s75 = scalar_select %p72, %s73, %s74
    %p78 = pneg %p72
    %p79 = scmp.eq.s32.totalorder %s11, 1
    %p80 = por %p78, %p79
    %p81 = scmp.ne.s32.totalorder %s73, %s76
    %p82 = scmp.eq.s32.totalorder %s11, 0
    %p83 = por %p81, %p82
    %p84 = scmp.ne.s32.totalorder %s73, %s76
    %p85 = scmp.eq.s32.totalorder %s16, 1
    %p86 = por %p84, %p85
    %p87 = scmp.ne.s32.totalorder %s76, %s77
    %p88 = scmp.eq.s32.totalorder %s16, 0
    %p89 = por %p87, %p88
    %p90 = scmp.ne.s32.totalorder %s76, %s77
    %p91 = scmp.eq.s32.totalorder %s17, 1
    %p92 = por %p90, %p91
    %p94 = scmp.ne.s32.totalorder %s77, %s93
    %p95 = scmp.eq.s32.totalorder %s17, 0
    %p96 = por %p94, %p95
    %s97 = ssub.s32 %s11, %s18
    %p98 = scmp.eq.s32.totalorder %s97, 0
    %s100 = sadd.s32 %s99, 1
    %s101 = scalar_select %p98, %s99, %s100
    %p104 = pneg %p98
    %p105 = scmp.eq.s32.totalorder %s11, 1
    %p106 = por %p104, %p105
    %p107 = scmp.ne.s32.totalorder %s99, %s102
    %p108 = scmp.eq.s32.totalorder %s11, 0
    %p109 = por %p107, %p108
    %p110 = scmp.ne.s32.totalorder %s99, %s102
    %p111 = scmp.eq.s32.totalorder %s16, 1
    %p112 = por %p110, %p111
    %p113 = scmp.ne.s32.totalorder %s102, %s103
    %p114 = scmp.eq.s32.totalorder %s16, 0
    %p115 = por %p113, %p114
    %p116 = scmp.ne.s32.totalorder %s102, %s103
    %p117 = scmp.eq.s32.totalorder %s17, 1
    %p118 = por %p116, %p117
    %p120 = scmp.ne.s32.totalorder %s103, %s119
    %p121 = scmp.eq.s32.totalorder %s17, 0
    %p122 = por %p120, %p121
    %s123 = ssub.s32 %s11, %s18
    %p124 = scmp.eq.s32.totalorder %s123, 0
    %s126 = sadd.s32 %s125, 1
    %s127 = scalar_select %p124, %s125, %s126
    %p130 = pneg %p124
    %p131 = scmp.eq.s32.totalorder %s11, 1
    %p132 = por %p130, %p131
    %p133 = scmp.ne.s32.totalorder %s125, %s128
    %p134 = scmp.eq.s32.totalorder %s11, 0
    %p135 = por %p133, %p134
    %p136 = scmp.ne.s32.totalorder %s125, %s128
    %p137 = scmp.eq.s32.totalorder %s16, 1
    %p138 = por %p136, %p137
    %p139 = scmp.ne.s32.totalorder %s128, %s129
    %p140 = scmp.eq.s32.totalorder %s16, 0
    %p141 = por %p139, %p140
    %p142 = scmp.ne.s32.totalorder %s128, %s129
    %p143 = scmp.eq.s32.totalorder %s17, 1
    %p144 = por %p142, %p143
    %p146 = scmp.ne.s32.totalorder %s129, %s145
    %p147 = scmp.eq.s32.totalorder %s17, 0
    %p148 = por %p146, %p147
    %p149 = scmp.le.s32.totalorder 1, %s11
    %p150 = scmp.lt.s32.totalorder %s11, 3
    %p151 = pnand %p149, %p150
    %p152 = pneg %p151
    // Predicated region
    $region9: #{_sharpe_loss_device.1} parent=5 // pred_check
      _
    $region10: #{_sharpe_loss_device.1} parent=5 // pred_check_branch
      %154 = sbr.rel (%p151) target = $region12
    $region11: #{_sharpe_loss_device.1} parent=5 // pred_region
      %s155 = ssub.s32 %s11, 1
    $region12: #{_sharpe_loss_device.1} parent=5 // pred_fallthru
      _
    %p156 = scmp.lt.s32.totalorder %s11, 2
    // Predicated region
    $region13: #{_sharpe_loss_device.1} parent=5 // pred_check
      %p157 = pneg %p156
    $region14: #{_sharpe_loss_device.1} parent=5 // pred_check_branch
      %159 = sbr.rel (%p157) target = $region16
    $region15: #{_sharpe_loss_device.1} parent=5 // pred_region
      // Predicated region
      $region17: #{_sharpe_loss_device.1} parent=15 // pred_check
        %p160 = pneg %p31
      $region18: #{_sharpe_loss_device.1} parent=15 // pred_check_branch
        %162 = sbr.rel (%p160) target = $region20
      $region19: #{_sharpe_loss_device.1} parent=15 // pred_region
        %s163 = smul.u32 2, %s11
        %p164 = scmp.lt.s32.totalorder %s163, 3
        %s165 = scalar_select %p164, %s163, 3
        %s166 = smul.addr %s165, 4
        %s167 = smul.addr %s166, 8
        %s168 = scalar_lea.vmem %s0, %s167
        %s169 = smul.u32 2, %s11
      $region20: #{_sharpe_loss_device.1} parent=15 // pred_fallthru
        _
      // Predicated region
      $region21: #{_sharpe_loss_device.1} parent=15 // pred_check
        %p170 = pneg %p57
      $region22: #{_sharpe_loss_device.1} parent=15 // pred_check_branch
        %172 = sbr.rel (%p170) target = $region24
      $region23: #{_sharpe_loss_device.1} parent=15 // pred_region
        %s173 = smul.u32 2, %s11
        %p174 = scmp.lt.s32.totalorder %s173, 3
        %s175 = scalar_select %p174, %s173, 3
        %s176 = smul.addr %s175, 4
        %s177 = smul.addr %s176, 8
        %s178 = scalar_lea.vmem %s1, %s177
        %s179 = smul.u32 2, %s11
      $region24: #{_sharpe_loss_device.1} parent=15 // pred_fallthru
        _
      // Predicated region
      $region25: #{_sharpe_loss_device.1} parent=15 // pred_check
        %p180 = pneg %p83
      $region26: #{_sharpe_loss_device.1} parent=15 // pred_check_branch
        %182 = sbr.rel (%p180) target = $region28
      $region27: #{_sharpe_loss_device.1} parent=15 // pred_region
        %s183 = smul.u32 2, %s11
        %p184 = scmp.lt.s32.totalorder %s183, 3
        %s185 = scalar_select %p184, %s183, 3
        %s186 = smul.addr %s185, 4
        %s187 = smul.addr %s186, 8
        %s188 = scalar_lea.vmem %s2, %s187
        %s189 = smul.u32 2, %s11
      $region28: #{_sharpe_loss_device.1} parent=15 // pred_fallthru
        _
    $region16: #{_sharpe_loss_device.1} parent=5 // pred_fallthru
      _
    %p190 = scmp.le.s32.totalorder 1, %s11
    %p191 = scmp.lt.s32.totalorder %s11, 3
    %p192 = pnand %p190, %p191
    %p193 = pneg %p192
    // Predicated region
    $region29: #{_sharpe_loss_device.1} parent=5 // pred_check
      _
    $region30: #{_sharpe_loss_device.1} parent=5 // pred_check_branch
      %195 = sbr.rel (%p192) target = $region32
    $region31: #{_sharpe_loss_device.1} parent=5 // pred_region
      %s196 = ssub.s32 %s11, 1
      %s197 = smul.u32 2, %s16
      %p198 = scmp.lt.s32.totalorder %s197, 3
      %s199 = scalar_select %p198, %s197, 3
      %s200 = smul.addr %s199, 4
      %s201 = smul.addr %s200, 8
      %s202 = scalar_lea.vmem %s0, %s201
      %p203 = pneg %p37
      %p204 = pneg %p34
      %s205 = smul.u32 2, %s16
      %p206 = scmp.lt.s32.totalorder %s205, 3
      %s207 = scalar_select %p206, %s205, 3
      %s208 = smul.addr %s207, 4
      %s209 = smul.addr %s208, 8
      %s210 = scalar_lea.vmem %s1, %s209
      %p211 = pneg %p63
      %p212 = pneg %p60
      %s213 = smul.u32 2, %s16
      %p214 = scmp.lt.s32.totalorder %s213, 3
      %s215 = scalar_select %p214, %s213, 3
      %s216 = smul.addr %s215, 4
      %s217 = smul.addr %s216, 8
      %s218 = scalar_lea.vmem %s2, %s217
      %p219 = pneg %p89
      %p220 = pneg %p86
      %p221 = pneg %p115
      %p222 = pneg %p112
      %s223 = smul.u32 2, %s16
      %p224 = scmp.lt.s32.totalorder %s223, 3
      %s225 = scalar_select %p224, %s223, 3
      %s226 = scalar_lea.vmem %s3, %s225
      %p227 = pneg %p141
      %p228 = pneg %p138
      %s229 = smul.u32 2, %s16
      %p230 = scmp.lt.s32.totalorder %s229, 3
      %s231 = scalar_select %p230, %s229, 3
      %s232 = scalar_lea.vmem %s4, %s231
      %s233 = smul.u32 2, %s16
      %p234 = scmp.lt.s32.totalorder %s233, 3
      %s235 = scalar_select %p234, %s233, 3
      %s236 = smul.addr %s235, 4
      %s237 = smul.addr %s236, 8
      %s238 = scalar_lea.vmem %s0, %s237
      %s239 = smul.u32 2, %s16
      %s240 = smul.u32 2, %s16
      %p241 = scmp.lt.s32.totalorder %s240, 3
      %s242 = scalar_select %p241, %s240, 3
      %s243 = smul.addr %s242, 4
      %s244 = smul.addr %s243, 8
      %s245 = scalar_lea.vmem %s1, %s244
      %s246 = smul.u32 2, %s16
      %s247 = smul.u32 2, %s16
      %p248 = scmp.lt.s32.totalorder %s247, 3
      %s249 = scalar_select %p248, %s247, 3
      %s250 = smul.addr %s249, 4
      %s251 = smul.addr %s250, 8
      %s252 = scalar_lea.vmem %s2, %s251
      %s253 = smul.u32 2, %s16
      %s254 = smul.u32 2, %s16
      %p255 = scmp.lt.s32.totalorder %s254, 3
      %s256 = scalar_select %p255, %s254, 3
      %s257 = scalar_lea.vmem %s3, %s256
      %s258 = smul.u32 2, %s16
      %s259 = smul.u32 2, %s16
      %p260 = scmp.lt.s32.totalorder %s259, 3
      %s261 = scalar_select %p260, %s259, 3
      %s262 = scalar_lea.vmem %s4, %s261
      %s263 = smul.u32 2, %s16
      %v264 = vld [vmem:[%s238] sm:$0xff]
      %v265 = vld [vmem:[%s238 + $0x8] sm:$0xff]
      %v266 = vld [vmem:[%s238 + $0x10] sm:$0xff]
      %v267 = vld [vmem:[%s238 + $0x18] sm:$0xff]
      %v268 = vld [vmem:[%s238 + $0x20] sm:$0xff]
      %v269 = vld [vmem:[%s238 + $0x28] sm:$0xff]
      %v270 = vld [vmem:[%s238 + $0x30] sm:$0xff]
      %v271 = vld [vmem:[%s238 + $0x38] sm:$0xff]
      %v272 = vld [vmem:[%s245] sm:$0xff]
      %v273 = vld [vmem:[%s245 + $0x8] sm:$0xff]
      %v274 = vld [vmem:[%s245 + $0x10] sm:$0xff]
      %v275 = vld [vmem:[%s245 + $0x18] sm:$0xff]
      %v276 = vld [vmem:[%s245 + $0x20] sm:$0xff]
      %v277 = vld [vmem:[%s245 + $0x28] sm:$0xff]
      %v278 = vld [vmem:[%s245 + $0x30] sm:$0xff]
      %v279 = vld [vmem:[%s245 + $0x38] sm:$0xff]
      %v280 = vld [vmem:[%s252] sm:$0xff]
      %v281 = vld [vmem:[%s252 + $0x8] sm:$0xff]
      %v282 = vld [vmem:[%s252 + $0x10] sm:$0xff]
      %v283 = vld [vmem:[%s252 + $0x18] sm:$0xff]
      %v284 = vld [vmem:[%s252 + $0x20] sm:$0xff]
      %v285 = vld [vmem:[%s252 + $0x28] sm:$0xff]
      %v286 = vld [vmem:[%s252 + $0x30] sm:$0xff]
      %v287 = vld [vmem:[%s252 + $0x38] sm:$0xff]
      %vm288 = vcmask 130048
      %v289 = vsel %vm288, %v264, -inf
      %290 = vmax.xlane.f32.xlu0 %v289
      %v291 = vpop.xlane.xlu0 %290
      %v292 = vsel %vm288, %v265, -inf
      %293 = vmax.xlane.f32.xlu0 %v292
      %v294 = vpop.xlane.xlu0 %293
      %v295 = vsel %vm288, %v266, -inf
      %296 = vmax.xlane.f32.xlu0 %v295
      %v297 = vpop.xlane.xlu0 %296
      %v298 = vsel %vm288, %v267, -inf
      %299 = vmax.xlane.f32.xlu0 %v298
      %v300 = vpop.xlane.xlu0 %299
      %v301 = vsel %vm288, %v268, -inf
      %302 = vmax.xlane.f32.xlu0 %v301
      %v303 = vpop.xlane.xlu0 %302
      %v304 = vsel %vm288, %v269, -inf
      %305 = vmax.xlane.f32.xlu0 %v304
      %v306 = vpop.xlane.xlu0 %305
      %v307 = vsel %vm288, %v270, -inf
      %308 = vmax.xlane.f32.xlu0 %v307
      %v309 = vpop.xlane.xlu0 %308
      %v310 = vsel %vm288, %v271, -inf
      %311 = vmax.xlane.f32.xlu0 %v310
      %v312 = vpop.xlane.xlu0 %311
      %v313 = vsub.f32 %v264, %v291
      %v314 = vsub.f32 %v265, %v294
      %v315 = vsub.f32 %v266, %v297
      %v316 = vsub.f32 %v267, %v300
      %v317 = vsub.f32 %v268, %v303
      %v318 = vsub.f32 %v269, %v306
      %v319 = vsub.f32 %v270, %v309
      %v320 = vsub.f32 %v271, %v312
      %v321 = vmul.f32 %v313, 1.442695
      %v322 = vpow.pop %v321
      %v323 = vmul.f32 %v314, 1.442695
      %v324 = vpow.pop %v323
      %v325 = vmul.f32 %v315, 1.442695
      %v326 = vpow.pop %v325
      %v327 = vmul.f32 %v316, 1.442695
      %v328 = vpow.pop %v327
      %v329 = vmul.f32 %v317, 1.442695
      %v330 = vpow.pop %v329
      %v331 = vmul.f32 %v318, 1.442695
      %v332 = vpow.pop %v331
      %v333 = vmul.f32 %v319, 1.442695
      %v334 = vpow.pop %v333
      %v335 = vmul.f32 %v320, 1.442695
      %v336 = vpow.pop %v335
      %v337 = vsel %vm288, %v322, 0.0
      %338 = vadd.xlane.f32.xlu0 %v337
      %v339 = vpop.xlane.xlu0 %338
      %v340 = vsel %vm288, %v324, 0.0
      %341 = vadd.xlane.f32.xlu0 %v340
      %v342 = vpop.xlane.xlu0 %341
      %v343 = vsel %vm288, %v326, 0.0
      %344 = vadd.xlane.f32.xlu0 %v343
      %v345 = vpop.xlane.xlu0 %344
      %v346 = vsel %vm288, %v328, 0.0
      %347 = vadd.xlane.f32.xlu0 %v346
      %v348 = vpop.xlane.xlu0 %347
      %v349 = vsel %vm288, %v330, 0.0
      %350 = vadd.xlane.f32.xlu0 %v349
      %v351 = vpop.xlane.xlu0 %350
      %v352 = vsel %vm288, %v332, 0.0
      %353 = vadd.xlane.f32.xlu0 %v352
      %v354 = vpop.xlane.xlu0 %353
      %v355 = vsel %vm288, %v334, 0.0
      %356 = vadd.xlane.f32.xlu0 %v355
      %v357 = vpop.xlane.xlu0 %356
      %v358 = vsel %vm288, %v336, 0.0
      %359 = vadd.xlane.f32.xlu0 %v358
      %v360 = vpop.xlane.xlu0 %359
      %v361 = vrcp.pop %v339
      %v362 = vmul.f32 %v322, %v361
      %v363 = vrcp.pop %v342
      %v364 = vmul.f32 %v324, %v363
      %v365 = vrcp.pop %v345
      %v366 = vmul.f32 %v326, %v365
      %v367 = vrcp.pop %v348
      %v368 = vmul.f32 %v328, %v367
      %v369 = vrcp.pop %v351
      %v370 = vmul.f32 %v330, %v369
      %v371 = vrcp.pop %v354
      %v372 = vmul.f32 %v332, %v371
      %v373 = vrcp.pop %v357
      %v374 = vmul.f32 %v334, %v373
      %v375 = vrcp.pop %v360
      %v376 = vmul.f32 %v336, %v375
      %v377 = vmul.f32 %v362, 0.1
      %v378 = vmul.f32 %v364, 0.1
      %v379 = vmul.f32 %v366, 0.1
      %v380 = vmul.f32 %v368, 0.1
      %v381 = vmul.f32 %v370, 0.1
      %v382 = vmul.f32 %v372, 0.1
      %v383 = vmul.f32 %v374, 0.1
      %v384 = vmul.f32 %v376, 0.1
      %v385 = vadd.f32 %v280, 1e-14
      %v386 = vadd.f32 %v281, 1e-14
      %v387 = vadd.f32 %v282, 1e-14
      %v388 = vadd.f32 %v283, 1e-14
      %v389 = vadd.f32 %v284, 1e-14
      %v390 = vadd.f32 %v285, 1e-14
      %v391 = vadd.f32 %v286, 1e-14
      %v392 = vadd.f32 %v287, 1e-14
      %v393 = vrcp.pop %v385
      %v394 = vmul.f32 %v377, %v393
      %v395 = vrcp.pop %v386
      %v396 = vmul.f32 %v378, %v395
      %v397 = vrcp.pop %v387
      %v398 = vmul.f32 %v379, %v397
      %v399 = vrcp.pop %v388
      %v400 = vmul.f32 %v380, %v399
      %v401 = vrcp.pop %v389
      %v402 = vmul.f32 %v381, %v401
      %v403 = vrcp.pop %v390
      %v404 = vmul.f32 %v382, %v403
      %v405 = vrcp.pop %v391
      %v406 = vmul.f32 %v383, %v405
      %v407 = vrcp.pop %v392
      %v408 = vmul.f32 %v384, %v407
      %v409 = vmul.f32 %v394, %v272
      %v410 = vmul.f32 %v396, %v273
      %v411 = vmul.f32 %v398, %v274
      %v412 = vmul.f32 %v400, %v275
      %v413 = vmul.f32 %v402, %v276
      %v414 = vmul.f32 %v404, %v277
      %v415 = vmul.f32 %v406, %v278
      %v416 = vmul.f32 %v408, %v279
      %v417 = vsel %vm288, %v409, 0.0
      %418 = vadd.xlane.f32.xlu0 %v417
      %v419 = vpop.xlane.xlu0 %418
      %v420 = vsel %vm288, %v410, 0.0
      %421 = vadd.xlane.f32.xlu0 %v420
      %v422 = vpop.xlane.xlu0 %421
      %v423 = vsel %vm288, %v411, 0.0
      %424 = vadd.xlane.f32.xlu0 %v423
      %v425 = vpop.xlane.xlu0 %424
      %v426 = vsel %vm288, %v412, 0.0
      %427 = vadd.xlane.f32.xlu0 %v426
      %v428 = vpop.xlane.xlu0 %427
      %v429 = vsel %vm288, %v413, 0.0
      %430 = vadd.xlane.f32.xlu0 %v429
      %v431 = vpop.xlane.xlu0 %430
      %v432 = vsel %vm288, %v414, 0.0
      %433 = vadd.xlane.f32.xlu0 %v432
      %v434 = vpop.xlane.xlu0 %433
      %v435 = vsel %vm288, %v415, 0.0
      %436 = vadd.xlane.f32.xlu0 %v435
      %v437 = vpop.xlane.xlu0 %436
      %v438 = vsel %vm288, %v416, 0.0
      %439 = vadd.xlane.f32.xlu0 %v438
      %v440 = vpop.xlane.xlu0 %439
      %v441 = vrot.slane %v394, 7
      %v442 = vrot.slane %v402, 7
      %v443 = vrot.slane %v396, 7
      %v444 = vrot.slane %v404, 7
      %v445 = vrot.slane %v398, 7
      %v446 = vrot.slane %v406, 7
      %v447 = vrot.slane %v400, 7
      %v448 = vrot.slane %v408, 7
      %v449 = vlaneseq
      %v450 = vshrl.u32 %v449, 7
      %vm451 = vcmp.lt.s32.totalorder %v450, 1
      %v452 = vsel %vm451, %v445, %v447
      %v453 = vsel %vm451, %v446, %v448
      %v454 = vsel %vm451, %v443, %v445
      %v455 = vsel %vm451, %v444, %v446
      %v456 = vsel %vm451, %v441, %v443
      %v457 = vsel %vm451, %v442, %v444
      %v458 = vsel %vm451, %v447, %v441
      %v459 = vsel %vm451, %v448, %v442
      %v460 = vsub.f32 %v394, %v458
      %v461 = vsub.f32 %v396, %v456
      %v462 = vsub.f32 %v398, %v454
      %v463 = vsub.f32 %v400, %v452
      %v464 = vsub.f32 %v402, %v459
      %v465 = vsub.f32 %v404, %v457
      %v466 = vsub.f32 %v406, %v455
      %v467 = vsub.f32 %v408, %v453
      %v468 = vand.u32 2147483647, %v460
      %v469 = vand.u32 2147483647, %v461
      %v470 = vand.u32 2147483647, %v462
      %v471 = vand.u32 2147483647, %v463
      %v472 = vand.u32 2147483647, %v464
      %v473 = vand.u32 2147483647, %v465
      %v474 = vand.u32 2147483647, %v466
      %v475 = vand.u32 2147483647, %v467
      %v476 = vsel %vm288, %v468, 0.0
      %477 = vadd.xlane.f32.xlu0 %v476
      %v478 = vpop.xlane.xlu0 %477
      %v479 = vsel %vm288, %v469, 0.0
      %480 = vadd.xlane.f32.xlu0 %v479
      %v481 = vpop.xlane.xlu0 %480
      %v482 = vsel %vm288, %v470, 0.0
      %483 = vadd.xlane.f32.xlu0 %v482
      %v484 = vpop.xlane.xlu0 %483
      %v485 = vsel %vm288, %v471, 0.0
      %486 = vadd.xlane.f32.xlu0 %v485
      %v487 = vpop.xlane.xlu0 %486
      %v488 = vsel %vm288, %v472, 0.0
      %489 = vadd.xlane.f32.xlu0 %v488
      %v490 = vpop.xlane.xlu0 %489
      %v491 = vsel %vm288, %v473, 0.0
      %492 = vadd.xlane.f32.xlu0 %v491
      %v493 = vpop.xlane.xlu0 %492
      %v494 = vsel %vm288, %v474, 0.0
      %495 = vadd.xlane.f32.xlu0 %v494
      %v496 = vpop.xlane.xlu0 %495
      %v497 = vsel %vm288, %v475, 0.0
      %498 = vadd.xlane.f32.xlu0 %v497
      %v499 = vpop.xlane.xlu0 %498
      %v500 = vmul.f32 %v478, 0.001
      %v501 = vmul.f32 %v481, 0.001
      %v502 = vmul.f32 %v484, 0.001
      %v503 = vmul.f32 %v487, 0.001
      %v504 = vmul.f32 %v490, 0.001
      %v505 = vmul.f32 %v493, 0.001
      %v506 = vmul.f32 %v496, 0.001
      %v507 = vmul.f32 %v499, 0.001
      %v508 = vadd.s32 %v450, 8
      %v509 = vadd.s32 %v450, 16
      %v510 = vadd.s32 %v450, 24
      %vm511 = vcmp.eq.s32.totalorder %v450, 1
      %vm512 = vcmp.eq.s32.totalorder %v508, 1
      %vm513 = vcmp.eq.s32.totalorder %v509, 1
      %vm514 = vcmp.eq.s32.totalorder %v510, 1
      %v515 = vsel %vm511, 1, 0
      %v516 = vsel %vm512, 1, 0
      %v517 = vsel %vm513, 1, 0
      %v518 = vsel %vm514, 1, 0
      %vm519 = vcmp.eq.s32.totalorder %v515, 1
      %vm520 = vcmp.eq.s32.totalorder %v516, 1
      %vm521 = vcmp.eq.s32.totalorder %v517, 1
      %vm522 = vcmp.eq.s32.totalorder %v518, 1
      %v523 = vsel %vm519, %v500, 0.0
      %v524 = vsel %vm520, %v501, 0.0
      %v525 = vsel %vm521, %v502, 0.0
      %v526 = vsel %vm522, %v503, 0.0
      %v527 = vsel %vm519, %v504, 0.0
      %v528 = vsel %vm520, %v505, 0.0
      %v529 = vsel %vm521, %v506, 0.0
      %v530 = vsel %vm522, %v507, 0.0
      %v531 = vadd.f32 %v523, %v524
      %v532 = vadd.f32 %v531, %v525
      %v533 = vadd.f32 %v532, %v526
      %v534 = vrot.slane %v533, 4
      %v535 = vadd.f32 %v533, %v534
      %v536 = vrot.slane %v535, 2
      %v537 = vadd.f32 %v535, %v536
      %v538 = vrot.slane %v537, 1
      %v539 = vadd.f32 %v537, %v538
      %v540 = vadd.f32 %v527, %v528
      %v541 = vadd.f32 %v540, %v529
      %v542 = vadd.f32 %v541, %v530
      %v543 = vrot.slane %v542, 4
      %v544 = vadd.f32 %v542, %v543
      %v545 = vrot.slane %v544, 2
      %v546 = vadd.f32 %v544, %v545
      %v547 = vrot.slane %v546, 1
      %v548 = vadd.f32 %v546, %v547
      %vm549 = vcmp.eq.s32.totalorder %v450, 0
      %vm550 = vcmp.eq.s32.totalorder %v508, 0
      %vm551 = vcmp.eq.s32.totalorder %v509, 0
      %vm552 = vcmp.eq.s32.totalorder %v510, 0
      %v553 = vsel %vm549, 1, 0
      %v554 = vsel %vm550, 1, 0
      %v555 = vsel %vm551, 1, 0
      %v556 = vsel %vm552, 1, 0
      %vm557 = vcmp.eq.s32.totalorder %v553, 1
      %vm558 = vcmp.eq.s32.totalorder %v554, 1
      %vm559 = vcmp.eq.s32.totalorder %v555, 1
      %vm560 = vcmp.eq.s32.totalorder %v556, 1
      %v561 = vsel %vm557, %v539, %v500
      %v562 = vsel %vm558, %v539, %v501
      %v563 = vsel %vm559, %v539, %v502
      %v564 = vsel %vm560, %v539, %v503
      %v565 = vsel %vm557, %v548, %v504
      %v566 = vsel %vm558, %v548, %v505
      %v567 = vsel %vm559, %v548, %v506
      %v568 = vsel %vm560, %v548, %v507
      %v569 = vsub.f32 %v419, %v561
      %v570 = vsub.f32 %v422, %v562
      %v571 = vsub.f32 %v425, %v563
      %v572 = vsub.f32 %v428, %v564
      %v573 = vsub.f32 %v431, %v565
      %v574 = vsub.f32 %v434, %v566
      %v575 = vsub.f32 %v437, %v567
      %v576 = vsub.f32 %v440, %v568
      %v577 = vadd.f32 %v569, %v570
      %v578 = vadd.f32 %v577, %v571
      %v579 = vadd.f32 %v578, %v572
      %v580 = vrot.slane %v579, 4
      %v581 = vadd.f32 %v579, %v580
      %v582 = vrot.slane %v581, 2
      %v583 = vadd.f32 %v581, %v582
      %v584 = vrot.slane %v583, 1
      %v585 = vadd.f32 %v583, %v584
      %v586 = vadd.f32 %v573, %v574
      %v587 = vadd.f32 %v586, %v575
      %v588 = vadd.f32 %v587, %v576
      %v589 = vrot.slane %v588, 4
      %v590 = vadd.f32 %v588, %v589
      %v591 = vrot.slane %v590, 2
      %v592 = vadd.f32 %v590, %v591
      %v593 = vrot.slane %v592, 1
      %v594 = vadd.f32 %v592, %v593
      %v595 = vmul.f32 %v585, 0.03125
      %v596 = vmul.f32 %v594, 0.03125
      %v597 = vsub.f32 %v569, %v595
      %v598 = vsub.f32 %v570, %v595
      %v599 = vsub.f32 %v571, %v595
      %v600 = vsub.f32 %v572, %v595
      %v601 = vsub.f32 %v573, %v596
      %v602 = vsub.f32 %v574, %v596
      %v603 = vsub.f32 %v575, %v596
      %v604 = vsub.f32 %v576, %v596
      %v605 = vmul.f32 %v597, %v597
      %v606 = vmul.f32 %v598, %v598
      %v607 = vmul.f32 %v599, %v599
      %v608 = vmul.f32 %v600, %v600
      %v609 = vmul.f32 %v601, %v601
      %v610 = vmul.f32 %v602, %v602
      %v611 = vmul.f32 %v603, %v603
      %v612 = vmul.f32 %v604, %v604
      %v613 = vadd.f32 %v605, %v606
      %v614 = vadd.f32 %v613, %v607
      %v615 = vadd.f32 %v614, %v608
      %v616 = vrot.slane %v615, 4
      %v617 = vadd.f32 %v615, %v616
      %v618 = vrot.slane %v617, 2
      %v619 = vadd.f32 %v617, %v618
      %v620 = vrot.slane %v619, 1
      %v621 = vadd.f32 %v619, %v620
      %v622 = vadd.f32 %v609, %v610
      %v623 = vadd.f32 %v622, %v611
      %v624 = vadd.f32 %v623, %v612
      %v625 = vrot.slane %v624, 4
      %v626 = vadd.f32 %v624, %v625
      %v627 = vrot.slane %v626, 2
      %v628 = vadd.f32 %v626, %v627
      %v629 = vrot.slane %v628, 1
      %v630 = vadd.f32 %v628, %v629
      %v631 = vmul.f32 %v621, 0.032258064
      %v632 = vmul.f32 %v630, 0.032258064
      %v633 = vrsqrt.pop %v631
      %v634 = vmul.f32 %v631, %v633
      %vm635 = vcmp.eq.f32.partialorder %v631, inf
      %v636 = vsel %vm635, %v631, %v634
      %vm637 = vcmp.eq.f32.partialorder %v631, 0.0
      %v638 = vand.u32 %v631, 2147483648
      %v639 = vsel %vm637, %v638, %v636
      %v640 = vrsqrt.pop %v632
      %v641 = vmul.f32 %v632, %v640
      %vm642 = vcmp.eq.f32.partialorder %v632, inf
      %v643 = vsel %vm642, %v632, %v641
      %vm644 = vcmp.eq.f32.partialorder %v632, 0.0
      %v645 = vand.u32 %v632, 2147483648
      %v646 = vsel %vm644, %v645, %v643
      %v647 = vadd.f32 %v639, 1e-14
      %v648 = vadd.f32 %v646, 1e-14
      %v649 = vrcp.pop %v647
      %v650 = vmul.f32 %v595, %v649
      %v651 = vrcp.pop %v648
      %v652 = vmul.f32 %v596, %v651
      %vm653 = vcmask 0
      %654 = vst.msk [vmem:[%s257] sm:$0x1] %vm653, %v650
      %655 = vst.msk [vmem:[%s257 + $0x1] sm:$0x1] %vm653, %v652
      %656 = vst.msk [vmem:[%s262] sm:$0x1] %vm653, %v639
      %657 = vst.msk [vmem:[%s262 + $0x1] sm:$0x1] %vm653, %v646
      %s658 = smul.u32 2, %s16
      %p659 = scmp.lt.s32.totalorder %s658, 3
      %s660 = scalar_select %p659, %s658, 3
      %s661 = scalar_lea.vmem %s3, %s660
      %s662 = smul.u32 2, %s16
      %p663 = scmp.lt.s32.totalorder %s662, 3
      %s664 = scalar_select %p663, %s662, 3
      %s665 = scalar_lea.vmem %s4, %s664
      // Predicated region
      $region33: #{_sharpe_loss_device.1} parent=31 // pred_check
        %p666 = pneg %p112
      $region34: #{_sharpe_loss_device.1} parent=31 // pred_check_branch
        %668 = sbr.rel (%p666) target = $region36
      $region35: #{_sharpe_loss_device.1} parent=31 // pred_region
        %s669 = smul.u32 2, %s16
      $region36: #{_sharpe_loss_device.1} parent=31 // pred_fallthru
        _
      // Predicated region
      $region37: #{_sharpe_loss_device.1} parent=31 // pred_check
        %p670 = pneg %p138
      $region38: #{_sharpe_loss_device.1} parent=31 // pred_check_branch
        %672 = sbr.rel (%p670) target = $region40
      $region39: #{_sharpe_loss_device.1} parent=31 // pred_region
        %s673 = smul.u32 2, %s16
      $region40: #{_sharpe_loss_device.1} parent=31 // pred_fallthru
        _
    $region32: #{_sharpe_loss_device.1} parent=5 // pred_fallthru
      _
    %p674 = scmp.le.s32.totalorder 2, %s11
    // Predicated region
    $region41: #{_sharpe_loss_device.1} parent=5 // pred_check
      %p675 = pneg %p674
    $region42: #{_sharpe_loss_device.1} parent=5 // pred_check_branch
      %677 = sbr.rel (%p675) target = $region44
    $region43: #{_sharpe_loss_device.1} parent=5 // pred_region
      %s678 = ssub.s32 %s11, 2
      // Predicated region
      $region45: #{_sharpe_loss_device.1} parent=43 // pred_check
        %p679 = pneg %p118
      $region46: #{_sharpe_loss_device.1} parent=43 // pred_check_branch
        %681 = sbr.rel (%p679) target = $region48
      $region47: #{_sharpe_loss_device.1} parent=43 // pred_region
        %s682 = smul.u32 2, %s17
        %p683 = scmp.lt.s32.totalorder %s682, 3
        %s684 = scalar_select %p683, %s682, 3
        %s685 = scalar_lea.vmem %s3, %s684
      $region48: #{_sharpe_loss_device.1} parent=43 // pred_fallthru
        _
      // Predicated region
      $region49: #{_sharpe_loss_device.1} parent=43 // pred_check
        %p686 = pneg %p144
      $region50: #{_sharpe_loss_device.1} parent=43 // pred_check_branch
        %688 = sbr.rel (%p686) target = $region52
      $region51: #{_sharpe_loss_device.1} parent=43 // pred_region
        %s689 = smul.u32 2, %s17
        %p690 = scmp.lt.s32.totalorder %s689, 3
        %s691 = scalar_select %p690, %s689, 3
        %s692 = scalar_lea.vmem %s4, %s691
      $region52: #{_sharpe_loss_device.1} parent=43 // pred_fallthru
        _
    $region44: #{_sharpe_loss_device.1} parent=5 // pred_fallthru
      _
  $region6: #{_sharpe_loss_device.1} parent=0 // loop_footer
    %s15 = sadd.s32 1, %s11
  $region7: #{_sharpe_loss_device.1} parent=0 // loop_footer_branch
    %10 = sbr.rel target = $region3
  $region8: #{_sharpe_loss_device.1} parent=0 // loop_exit
    _

</llo_original>
